<compile_context>
chip_gen: v5e
topology: v5e:2x2
jax: 0.10.0
libtpu: 0.0.40
codegen_flags: <defaults>
</compile_context>

<pallas_src>
import jax
import jax.numpy as jnp
from jax.experimental import pallas as pl
from jax.experimental.pallas import tpu as pltpu

OUT_DIM = 3      # true output width of the last Linear layer
OUT_PAD = 128    # lane-dense padded output width (zero-padded weights/bias)


def _mlp_kernel(x_ref,
                w1_ref, b1_ref,
                w2_ref, b2_ref,
                w3_ref, b3_ref,
                w4_ref, b4_ref,
                out_ref):
    # Whole batch tile forward pass runs in VMEM.
    # bf16 matmul inputs (MXU-native), f32 accumulation / bias / ReLU.
    x = x_ref[...].astype(jnp.bfloat16)

    h = jnp.dot(x, w1_ref[...], preferred_element_type=jnp.float32) + b1_ref[...]
    h = jnp.maximum(h, 0.0).astype(jnp.bfloat16)

    h = jnp.dot(h, w2_ref[...], preferred_element_type=jnp.float32) + b2_ref[...]
    h = jnp.maximum(h, 0.0).astype(jnp.bfloat16)

    h = jnp.dot(h, w3_ref[...], preferred_element_type=jnp.float32) + b3_ref[...]
    h = jnp.maximum(h, 0.0).astype(jnp.bfloat16)

    h = jnp.dot(h, w4_ref[...], preferred_element_type=jnp.float32) + b4_ref[...]
    out_ref[...] = h.astype(out_ref.dtype)


def _batch_tile(b):
    """Batch tile: multiple of 8 sublanes, capped at 256 (v6e/v7x MXU edge)."""
    if b >= 256:
        return 256
    return max(8, ((b + 7) // 8) * 8)


def dqn2_forward(x, kernel_params):
    """x: (B, n_inputs) float32; kernel_params: bf16 weights / f32 biases
    (last layer zero-padded to OUT_PAD output lanes). Returns (B, 3) float32."""
    B, n_in = x.shape
    tile_b = _batch_tile(B)
    b_pad = ((B + tile_b - 1) // tile_b) * tile_b
    if b_pad != B:
        x = jnp.pad(x, ((0, b_pad - B), (0, 0)))
    grid = (b_pad // tile_b,)

    w1, b1 = kernel_params["w1"], kernel_params["b1"]
    w2, b2 = kernel_params["w2"], kernel_params["b2"]
    w3, b3 = kernel_params["w3"], kernel_params["b3"]
    w4, b4 = kernel_params["w4"], kernel_params["b4"]
    weights_and_biases = (w1, b1, w2, b2, w3, b3, w4, b4)

    def const_spec(a):
        # Full array as one block, constant index map -> stays VMEM-resident
        # across all batch-grid iterations (no per-tile weight re-DMA).
        return pl.BlockSpec(a.shape, lambda i: (0,) * a.ndim)

    in_specs = [pl.BlockSpec((tile_b, n_in), lambda i: (i, 0))]
    in_specs += [const_spec(a) for a in weights_and_biases]

    flops = 2 * b_pad * (n_in * 64 + 64 * 1024 + 1024 * 64 + 64 * OUT_PAD)
    bytes_accessed = (
        x.size * x.dtype.itemsize
        + sum(a.size * a.dtype.itemsize for a in weights_and_biases)
        + b_pad * OUT_PAD * 4
    )

    out_padded = pl.pallas_call(
        _mlp_kernel,
        out_shape=jax.ShapeDtypeStruct((b_pad, OUT_PAD), jnp.float32),
        grid_spec=pltpu.PrefetchScalarGridSpec(
            num_scalar_prefetch=0,
            grid=grid,
            in_specs=in_specs,
            out_specs=pl.BlockSpec((tile_b, OUT_PAD), lambda i: (i, 0)),
        ),
        compiler_params=pltpu.CompilerParams(
            dimension_semantics=("parallel",),
        ),
        cost_estimate=pl.CostEstimate(
            flops=flops, transcendentals=0, bytes_accessed=bytes_accessed),
    )(x, *weights_and_biases)

    return out_padded[:B, :OUT_DIM]


def init_params(n_inputs, key):
    """f32 params mimicking PyTorch nn.Linear default init (uniform ±1/sqrt(fan_in))."""
    dims = [(n_inputs, 64), (64, 1024), (1024, 64), (64, OUT_DIM)]
    params = {}
    keys = jax.random.split(key, 2 * len(dims))
    for i, (fan_in, fan_out) in enumerate(dims):
        bound = 1.0 / jnp.sqrt(jnp.float32(fan_in))
        w = jax.random.uniform(keys[2 * i], (fan_in, fan_out),
                               minval=-bound, maxval=bound, dtype=jnp.float32)
        b = jax.random.uniform(keys[2 * i + 1], (1, fan_out),
                               minval=-bound, maxval=bound, dtype=jnp.float32)
        params[f"w{i + 1}"] = w
        params[f"b{i + 1}"] = b
    return params


def prepare_kernel_params(params):
    """Kernel-side layout: bf16 weights (half the HBM->VMEM DMA), f32 biases,
    last layer zero-padded from 3 -> OUT_PAD output lanes for lane-dense stores."""
    kp = {}
    for i in range(1, 5):
        w = params[f"w{i}"]
        b = params[f"b{i}"]
        if i == 4:
            w = jnp.pad(w, ((0, 0), (0, OUT_PAD - w.shape[1])))
            b = jnp.pad(b, ((0, 0), (0, OUT_PAD - b.shape[1])))
        kp[f"w{i}"] = w.astype(jnp.bfloat16)
        kp[f"b{i}"] = b.astype(jnp.float32)
    return kp


def reference_forward(x, params):
    h = x
    for i in range(1, 4):
        h = jnp.maximum(h @ params[f"w{i}"] + params[f"b{i}"], 0.0)
    return h @ params["w4"] + params["b4"]


if __name__ == "__main__":
    key = jax.random.PRNGKey(0)
    k_param, k_x = jax.random.split(key)

    batch = 8
    n_inputs = 32

    params = init_params(n_inputs, k_param)
    kernel_params = prepare_kernel_params(params)
    x = jax.random.normal(k_x, (batch, n_inputs), dtype=jnp.float32)

    out = jax.block_until_ready(dqn2_forward(x, kernel_params))

    ref = reference_forward(x, params)
    assert out.shape == (batch, OUT_DIM), out.shape
    # bf16 matmul inputs with f32 accumulation -> slightly looser tolerance vs f32 ref.
    max_err = jnp.max(jnp.abs(out - ref))
    assert jnp.allclose(out, ref, atol=5e-2, rtol=5e-2), f"max abs err {max_err}"

    print("KERNEL_OK")
</pallas_src>

<mosaic_0001>
module attributes {stable_mosaic.version = 11 : i64} {
  func.func @_mlp_kernel(%arg0: i32, %arg1: memref<8x32xf32, #tpu.memory_space<vmem>>, %arg2: memref<32x64xbf16, #tpu.memory_space<vmem>>, %arg3: memref<1x64xf32, #tpu.memory_space<vmem>>, %arg4: memref<64x1024xbf16, #tpu.memory_space<vmem>>, %arg5: memref<1x1024xf32, #tpu.memory_space<vmem>>, %arg6: memref<1024x64xbf16, #tpu.memory_space<vmem>>, %arg7: memref<1x64xf32, #tpu.memory_space<vmem>>, %arg8: memref<64x128xbf16, #tpu.memory_space<vmem>>, %arg9: memref<1x128xf32, #tpu.memory_space<vmem>>, %arg10: memref<8x128xf32, #tpu.memory_space<vmem>>) attributes {dimension_semantics = [#tpu.dimension_semantics<parallel>], iteration_bounds = array<i64: 1>, scalar_prefetch = 0 : i64, scratch_operands = 0 : i64, tpu.core_type = #tpu.core_type<tc>, window_params = [{transform_indices = @transform_0, window_bounds = array<i64: 8, 32>}, {pipeline_mode = #tpu.pipeline_mode<synchronous>, transform_indices = @transform_1, window_bounds = array<i64: 32, 64>}, {pipeline_mode = #tpu.pipeline_mode<synchronous>, transform_indices = @transform_2, window_bounds = array<i64: 1, 64>}, {pipeline_mode = #tpu.pipeline_mode<synchronous>, transform_indices = @transform_3, window_bounds = array<i64: 64, 1024>}, {pipeline_mode = #tpu.pipeline_mode<synchronous>, transform_indices = @transform_4, window_bounds = array<i64: 1, 1024>}, {pipeline_mode = #tpu.pipeline_mode<synchronous>, transform_indices = @transform_5, window_bounds = array<i64: 1024, 64>}, {pipeline_mode = #tpu.pipeline_mode<synchronous>, transform_indices = @transform_6, window_bounds = array<i64: 1, 64>}, {pipeline_mode = #tpu.pipeline_mode<synchronous>, transform_indices = @transform_7, window_bounds = array<i64: 64, 128>}, {pipeline_mode = #tpu.pipeline_mode<synchronous>, transform_indices = @transform_8, window_bounds = array<i64: 1, 128>}, {transform_indices = @transform_9, window_bounds = array<i64: 8, 128>}]} {
    %c0 = arith.constant 0 : index
    %c0_0 = arith.constant 0 : index
    %0 = vector.load %arg1[%c0, %c0_0] : memref<8x32xf32, #tpu.memory_space<vmem>>, vector<8x32xf32>
    %1 = arith.truncf %0 : vector<8x32xf32> to vector<8x32xbf16>
    %c0_1 = arith.constant 0 : index
    %c0_2 = arith.constant 0 : index
    %2 = vector.load %arg2[%c0_1, %c0_2] : memref<32x64xbf16, #tpu.memory_space<vmem>>, vector<32x64xbf16>
    %cst = arith.constant dense<0.000000e+00> : vector<8x64xf32>
    %3 = tpu.matmul %1, %2, %cst {dimension_numbers = #tpu.dot_dimension_numbers<[1], [0], [0], [1], [0, 0, 1, 1], [], []>} : vector<8x32xbf16>, vector<32x64xbf16>, vector<8x64xf32> -> vector<8x64xf32>
    %c0_3 = arith.constant 0 : index
    %c0_4 = arith.constant 0 : index
    %4 = vector.load %arg3[%c0_3, %c0_4] : memref<1x64xf32, #tpu.memory_space<vmem>>, vector<1x64xf32>
    %5 = vector.broadcast %4 : vector<1x64xf32> to vector<8x64xf32>
    %6 = arith.addf %3, %5 : vector<8x64xf32>
    %cst_5 = arith.constant 0.000000e+00 : f32
    %7 = vector.broadcast %cst_5 : f32 to vector<8x64xf32>
    %8 = arith.maximumf %6, %7 : vector<8x64xf32>
    %9 = arith.truncf %8 : vector<8x64xf32> to vector<8x64xbf16>
    %c0_6 = arith.constant 0 : index
    %c0_7 = arith.constant 0 : index
    %10 = vector.load %arg4[%c0_6, %c0_7] : memref<64x1024xbf16, #tpu.memory_space<vmem>>, vector<64x1024xbf16>
    %cst_8 = arith.constant dense<0.000000e+00> : vector<8x1024xf32>
    %11 = tpu.matmul %9, %10, %cst_8 {dimension_numbers = #tpu.dot_dimension_numbers<[1], [0], [0], [1], [0, 0, 1, 1], [], []>} : vector<8x64xbf16>, vector<64x1024xbf16>, vector<8x1024xf32> -> vector<8x1024xf32>
    %c0_9 = arith.constant 0 : index
    %c0_10 = arith.constant 0 : index
    %12 = vector.load %arg5[%c0_9, %c0_10] : memref<1x1024xf32, #tpu.memory_space<vmem>>, vector<1x1024xf32>
    %13 = vector.broadcast %12 : vector<1x1024xf32> to vector<8x1024xf32>
    %14 = arith.addf %11, %13 : vector<8x1024xf32>
    %cst_11 = arith.constant 0.000000e+00 : f32
    %15 = vector.broadcast %cst_11 : f32 to vector<8x1024xf32>
    %16 = arith.maximumf %14, %15 : vector<8x1024xf32>
    %17 = arith.truncf %16 : vector<8x1024xf32> to vector<8x1024xbf16>
    %c0_12 = arith.constant 0 : index
    %c0_13 = arith.constant 0 : index
    %18 = vector.load %arg6[%c0_12, %c0_13] : memref<1024x64xbf16, #tpu.memory_space<vmem>>, vector<1024x64xbf16>
    %cst_14 = arith.constant dense<0.000000e+00> : vector<8x64xf32>
    %19 = tpu.matmul %17, %18, %cst_14 {dimension_numbers = #tpu.dot_dimension_numbers<[1], [0], [0], [1], [0, 0, 1, 1], [], []>} : vector<8x1024xbf16>, vector<1024x64xbf16>, vector<8x64xf32> -> vector<8x64xf32>
    %c0_15 = arith.constant 0 : index
    %c0_16 = arith.constant 0 : index
    %20 = vector.load %arg7[%c0_15, %c0_16] : memref<1x64xf32, #tpu.memory_space<vmem>>, vector<1x64xf32>
    %21 = vector.broadcast %20 : vector<1x64xf32> to vector<8x64xf32>
    %22 = arith.addf %19, %21 : vector<8x64xf32>
    %cst_17 = arith.constant 0.000000e+00 : f32
    %23 = vector.broadcast %cst_17 : f32 to vector<8x64xf32>
    %24 = arith.maximumf %22, %23 : vector<8x64xf32>
    %25 = arith.truncf %24 : vector<8x64xf32> to vector<8x64xbf16>
    %c0_18 = arith.constant 0 : index
    %c0_19 = arith.constant 0 : index
    %26 = vector.load %arg8[%c0_18, %c0_19] : memref<64x128xbf16, #tpu.memory_space<vmem>>, vector<64x128xbf16>
    %cst_20 = arith.constant dense<0.000000e+00> : vector<8x128xf32>
    %27 = tpu.matmul %25, %26, %cst_20 {dimension_numbers = #tpu.dot_dimension_numbers<[1], [0], [0], [1], [0, 0, 1, 1], [], []>} : vector<8x64xbf16>, vector<64x128xbf16>, vector<8x128xf32> -> vector<8x128xf32>
    %c0_21 = arith.constant 0 : index
    %c0_22 = arith.constant 0 : index
    %28 = vector.load %arg9[%c0_21, %c0_22] : memref<1x128xf32, #tpu.memory_space<vmem>>, vector<1x128xf32>
    %29 = vector.broadcast %28 : vector<1x128xf32> to vector<8x128xf32>
    %30 = arith.addf %27, %29 : vector<8x128xf32>
    %c0_23 = arith.constant 0 : index
    %c0_24 = arith.constant 0 : index
    %31 = vector.load %arg10[%c0_23, %c0_24] : memref<8x128xf32, #tpu.memory_space<vmem>>, vector<8x128xf32>
    tpu.vector_store %arg10[%c0_23, %c0_24], %30 {strides = array<i32>} : memref<8x128xf32, #tpu.memory_space<vmem>>, vector<8x128xf32>,
    return
  }
  func.func @transform_0(%arg0: i32) -> (i32, i32) {
    %c0_i32 = arith.constant 0 : i32
    %c0_i32_0 = arith.constant 0 : i32
    return %arg0, %c0_i32 : i32, i32
  }
  func.func @transform_1(%arg0: i32) -> (i32, i32) {
    %c0_i32 = arith.constant 0 : i32
    %c0_i32_0 = arith.constant 0 : i32
    %c0_i32_1 = arith.constant 0 : i32
    return %c0_i32, %c0_i32_0 : i32, i32
  }
  func.func @transform_2(%arg0: i32) -> (i32, i32) {
    %c0_i32 = arith.constant 0 : i32
    %c0_i32_0 = arith.constant 0 : i32
    %c0_i32_1 = arith.constant 0 : i32
    return %c0_i32, %c0_i32_0 : i32, i32
  }
  func.func @transform_3(%arg0: i32) -> (i32, i32) {
    %c0_i32 = arith.constant 0 : i32
    %c0_i32_0 = arith.constant 0 : i32
    %c0_i32_1 = arith.constant 0 : i32
    return %c0_i32, %c0_i32_0 : i32, i32
  }
  func.func @transform_4(%arg0: i32) -> (i32, i32) {
    %c0_i32 = arith.constant 0 : i32
    %c0_i32_0 = arith.constant 0 : i32
    %c0_i32_1 = arith.constant 0 : i32
    return %c0_i32, %c0_i32_0 : i32, i32
  }
  func.func @transform_5(%arg0: i32) -> (i32, i32) {
    %c0_i32 = arith.constant 0 : i32
    %c0_i32_0 = arith.constant 0 : i32
    %c0_i32_1 = arith.constant 0 : i32
    return %c0_i32, %c0_i32_0 : i32, i32
  }
  func.func @transform_6(%arg0: i32) -> (i32, i32) {
    %c0_i32 = arith.constant 0 : i32
    %c0_i32_0 = arith.constant 0 : i32
    %c0_i32_1 = arith.constant 0 : i32
    return %c0_i32, %c0_i32_0 : i32, i32
  }
  func.func @transform_7(%arg0: i32) -> (i32, i32) {
    %c0_i32 = arith.constant 0 : i32
    %c0_i32_0 = arith.constant 0 : i32
    %c0_i32_1 = arith.constant 0 : i32
    return %c0_i32, %c0_i32_0 : i32, i32
  }
  func.func @transform_8(%arg0: i32) -> (i32, i32) {
    %c0_i32 = arith.constant 0 : i32
    %c0_i32_0 = arith.constant 0 : i32
    %c0_i32_1 = arith.constant 0 : i32
    return %c0_i32, %c0_i32_0 : i32, i32
  }
  func.func @transform_9(%arg0: i32) -> (i32, i32) {
    %c0_i32 = arith.constant 0 : i32
    %c0_i32_0 = arith.constant 0 : i32
    return %arg0, %c0_i32 : i32, i32
  }
}

</mosaic_0001>

<llo_original>
// kernel: tpu_custom_call.1
$region0: #{tpu_custom_call.1}
  #allocation0 [shape = 'u32[]', space=smem, size = 0x4, offset = 0x4, fixed_abs, tag = 'smem constant byte address 0x4 - core index']
  #allocation1 [shape = 'u32[72,128]{1,0:T(1,128)}', space=vmem, size = 0x9000, scoped, tag = 'internal scratch']
  %s0 = inlined_call_operand.vmem [shape: f32[8,32], index: 0, kind: input, shape index: {}]
  %s1 = inlined_call_operand.vmem [shape: bf16[32,64], index: 1, kind: input, shape index: {}]
  %s2 = inlined_call_operand.vmem [shape: f32[1,64], index: 2, kind: input, shape index: {}]
  %s3 = inlined_call_operand.vmem [shape: bf16[64,1024], index: 3, kind: input, shape index: {}]
  %s4 = inlined_call_operand.vmem [shape: f32[1,1024], index: 4, kind: input, shape index: {}]
  %s5 = inlined_call_operand.vmem [shape: bf16[1024,64], index: 5, kind: input, shape index: {}]
  %s6 = inlined_call_operand.vmem [shape: f32[1,64], index: 6, kind: input, shape index: {}]
  %s7 = inlined_call_operand.vmem [shape: bf16[64,128], index: 7, kind: input, shape index: {}]
  %s8 = inlined_call_operand.vmem [shape: f32[1,128], index: 8, kind: input, shape index: {}]
  %s9 = inlined_call_operand.hbm [shape: f32[8,128], index: 9, kind: output, shape index: {}]
  %s10 = sld [smem:[#allocation0]]
  $region46: #{tpu_custom_call.1} parent=0
    _
  %s12 = ssub.s32 1, %s10
  %s13 = scalar_select 0, %s12, %s10
  $region1: #{tpu_custom_call.1} parent=0
    #allocation2 [shape = 'u8[4096]{0}', space=vmem, size = 0x1000, scoped, tag = 'output window, operand 0, single buffered']
    #allocation3 [shape = 's32[1]{0}', space=sflag, size = 0x4, scoped, tag = 'scoped memory for tpu_custom_call.1']
    %14 = vsyncpa [#allocation3], 0
    // Predicated region
    $region2: #{tpu_custom_call.1} parent=1 // pred_check
      _
    $region3: #{tpu_custom_call.1} parent=1 // pred_check_branch
      %16 = sbr.rel (0) target = $region5
    $region4: #{tpu_custom_call.1} parent=1 // pred_region
      _
    $region5: #{tpu_custom_call.1} parent=1 // pred_fallthru
      _
    // Predicated region
    $region6: #{tpu_custom_call.1} parent=1 // pred_check
      _
    $region7: #{tpu_custom_call.1} parent=1 // pred_check_branch
      %18 = sbr.rel (0) target = $region9
    $region8: #{tpu_custom_call.1} parent=1 // pred_region
      _
    $region9: #{tpu_custom_call.1} parent=1 // pred_fallthru
      _
    // Predicated region
    $region10: #{tpu_custom_call.1} parent=1 // pred_check
      _
    $region11: #{tpu_custom_call.1} parent=1 // pred_check_branch
      %20 = sbr.rel (0) target = $region13
    $region12: #{tpu_custom_call.1} parent=1 // pred_region
      _
    $region13: #{tpu_custom_call.1} parent=1 // pred_fallthru
      _
    // Predicated region
    $region14: #{tpu_custom_call.1} parent=1 // pred_check
      _
    $region15: #{tpu_custom_call.1} parent=1 // pred_check_branch
      %22 = sbr.rel (0) target = $region17
    $region16: #{tpu_custom_call.1} parent=1 // pred_region
      _
    $region17: #{tpu_custom_call.1} parent=1 // pred_fallthru
      _
    // Predicated region
    $region18: #{tpu_custom_call.1} parent=1 // pred_check
      _
    $region19: #{tpu_custom_call.1} parent=1 // pred_check_branch
      %24 = sbr.rel (0) target = $region21
    $region20: #{tpu_custom_call.1} parent=1 // pred_region
      _
    $region21: #{tpu_custom_call.1} parent=1 // pred_fallthru
      _
    // Predicated region
    $region22: #{tpu_custom_call.1} parent=1 // pred_check
      _
    $region23: #{tpu_custom_call.1} parent=1 // pred_check_branch
      %26 = sbr.rel (0) target = $region25
    $region24: #{tpu_custom_call.1} parent=1 // pred_region
      _
    $region25: #{tpu_custom_call.1} parent=1 // pred_fallthru
      _
    // Predicated region
    $region26: #{tpu_custom_call.1} parent=1 // pred_check
      _
    $region27: #{tpu_custom_call.1} parent=1 // pred_check_branch
      %28 = sbr.rel (0) target = $region29
    $region28: #{tpu_custom_call.1} parent=1 // pred_region
      _
    $region29: #{tpu_custom_call.1} parent=1 // pred_fallthru
      _
    // Predicated region
    $region30: #{tpu_custom_call.1} parent=1 // pred_check
      _
    $region31: #{tpu_custom_call.1} parent=1 // pred_check_branch
      %30 = sbr.rel (0) target = $region33
    $region32: #{tpu_custom_call.1} parent=1 // pred_region
      _
    $region33: #{tpu_custom_call.1} parent=1 // pred_fallthru
      _
    // Predicated region
    $region34: #{tpu_custom_call.1} parent=1 // pred_check
      _
    $region35: #{tpu_custom_call.1} parent=1 // pred_check_branch
      %32 = sbr.rel (0) target = $region37
    $region36: #{tpu_custom_call.1} parent=1 // pred_region
      _
    $region37: #{tpu_custom_call.1} parent=1 // pred_fallthru
      _
    %v34 = vld [vmem:[%s0] sm:$0xff]
    %v35 = vpack.c.bf16 %v34, %v34
    %v36 = vld [vmem:[%s1] sm:$0xf]
    %v37 = vld [vmem:[%s1 + $0x4] sm:$0xf]
    %v38 = vld [vmem:[%s1 + $0x8] sm:$0xf]
    %v39 = vld [vmem:[%s1 + $0xc] sm:$0xf]
    %v40 = vld [vmem:[%s2] sm:$0x1]
    %v42 = vperm.slane %v40, 0
    %v48 = vunpack.c.l.b16 %v36
    %v49 = vunpack.c.l.b16 %v37
    %v50 = vunpack.c.l.b16 %v38
    %v51 = vunpack.c.l.b16 %v39
    %v52 = vpack.c.b16 %v49, %v48
    %v53 = vpack.c.b16 %v51, %v50
    %vm56 = vcmask 261120
    %v58 = vsel %vm56, %v35, 0
    %60 = vmatpush.bf16.msra.mxu0 0
    %61 = vmatpush.bf16.msra.mxu0 0
    %62 = vmatpush.bf16.msra.mxu0 0
    %63 = vmatpush.bf16.msra.mxu0 0
    %64 = vmatpush.bf16.msra.mxu0 0
    %65 = vmatpush.bf16.msra.mxu0 0
    %66 = vmatpush.bf16.msra.mxu0 %v53
    %67 = vmatpush.bf16.msra.mxu0 %v52
    %68 = vmatmul.bf16.gmra.mxu0 %v58
    %v69 = vpop.f32.mrf.mxu0
    %v70 = vadd.f32 %v42, %v69
    %v71 = vpop.f32.mrf.mxu0
    %72 = vdwg.mxu0
    %v73 = vmax.f32 %v70, 0.0
    %v74 = vpack.c.bf16 %v73, %v73
    %v75 = vld [vmem:[%s3] sm:$0xff]
    %v76 = vld [vmem:[%s3 + $0x8] sm:$0xff]
    %v77 = vld [vmem:[%s3 + $0x10] sm:$0xff]
    %v78 = vld [vmem:[%s3 + $0x18] sm:$0xff]
    %v79 = vld [vmem:[%s3 + $0x20] sm:$0xff]
    %v80 = vld [vmem:[%s3 + $0x28] sm:$0xff]
    %v81 = vld [vmem:[%s3 + $0x30] sm:$0xff]
    %v82 = vld [vmem:[%s3 + $0x38] sm:$0xff]
    %v83 = vld [vmem:[%s3 + $0x40] sm:$0xff]
    %v84 = vld [vmem:[%s3 + $0x48] sm:$0xff]
    %v85 = vld [vmem:[%s3 + $0x50] sm:$0xff]
    %v86 = vld [vmem:[%s3 + $0x58] sm:$0xff]
    %v87 = vld [vmem:[%s3 + $0x60] sm:$0xff]
    %v88 = vld [vmem:[%s3 + $0x68] sm:$0xff]
    %v89 = vld [vmem:[%s3 + $0x70] sm:$0xff]
    %v90 = vld [vmem:[%s3 + $0x78] sm:$0xff]
    %v91 = vld [vmem:[%s3 + $0x80] sm:$0xff]
    %v92 = vld [vmem:[%s3 + $0x88] sm:$0xff]
    %v93 = vld [vmem:[%s3 + $0x90] sm:$0xff]
    %v94 = vld [vmem:[%s3 + $0x98] sm:$0xff]
    %v95 = vld [vmem:[%s3 + $0xa0] sm:$0xff]
    %v96 = vld [vmem:[%s3 + $0xa8] sm:$0xff]
    %v97 = vld [vmem:[%s3 + $0xb0] sm:$0xff]
    %v98 = vld [vmem:[%s3 + $0xb8] sm:$0xff]
    %v99 = vld [vmem:[%s3 + $0xc0] sm:$0xff]
    %v100 = vld [vmem:[%s3 + $0xc8] sm:$0xff]
    %v101 = vld [vmem:[%s3 + $0xd0] sm:$0xff]
    %v102 = vld [vmem:[%s3 + $0xd8] sm:$0xff]
    %v103 = vld [vmem:[%s3 + $0xe0] sm:$0xff]
    %v104 = vld [vmem:[%s3 + $0xe8] sm:$0xff]
    %v105 = vld [vmem:[%s3 + $0xf0] sm:$0xff]
    %v106 = vld [vmem:[%s3 + $0xf8] sm:$0xff]
    %v107 = vld [vmem:[%s4] sm:$0xff]
    %v109 = vperm.slane %v107, 0
    %v110 = vperm.slane %v107, 1
    %v111 = vperm.slane %v107, 2
    %v112 = vperm.slane %v107, 3
    %v113 = vperm.slane %v107, 4
    %v114 = vperm.slane %v107, 5
    %v115 = vperm.slane %v107, 6
    %v116 = vperm.slane %v107, 7
    %v157 = vunpack.c.l.b16 %v75
    %v158 = vunpack.c.h.b16 %v75
    %v159 = vunpack.c.l.b16 %v76
    %v160 = vunpack.c.h.b16 %v76
    %v161 = vunpack.c.l.b16 %v77
    %v162 = vunpack.c.h.b16 %v77
    %v163 = vunpack.c.l.b16 %v78
    %v164 = vunpack.c.h.b16 %v78
    %v165 = vunpack.c.l.b16 %v79
    %v166 = vunpack.c.h.b16 %v79
    %v167 = vunpack.c.l.b16 %v80
    %v168 = vunpack.c.h.b16 %v80
    %v169 = vunpack.c.l.b16 %v81
    %v170 = vunpack.c.h.b16 %v81
    %v171 = vunpack.c.l.b16 %v82
    %v172 = vunpack.c.h.b16 %v82
    %v173 = vunpack.c.l.b16 %v83
    %v174 = vunpack.c.h.b16 %v83
    %v175 = vunpack.c.l.b16 %v84
    %v176 = vunpack.c.h.b16 %v84
    %v177 = vunpack.c.l.b16 %v85
    %v178 = vunpack.c.h.b16 %v85
    %v179 = vunpack.c.l.b16 %v86
    %v180 = vunpack.c.h.b16 %v86
    %v181 = vunpack.c.l.b16 %v87
    %v182 = vunpack.c.h.b16 %v87
    %v183 = vunpack.c.l.b16 %v88
    %v184 = vunpack.c.h.b16 %v88
    %v185 = vunpack.c.l.b16 %v89
    %v186 = vunpack.c.h.b16 %v89
    %v187 = vunpack.c.l.b16 %v90
    %v188 = vunpack.c.h.b16 %v90
    %v189 = vunpack.c.l.b16 %v91
    %v190 = vunpack.c.h.b16 %v91
    %v191 = vunpack.c.l.b16 %v92
    %v192 = vunpack.c.h.b16 %v92
    %v193 = vunpack.c.l.b16 %v93
    %v194 = vunpack.c.h.b16 %v93
    %v195 = vunpack.c.l.b16 %v94
    %v196 = vunpack.c.h.b16 %v94
    %v197 = vunpack.c.l.b16 %v95
    %v198 = vunpack.c.h.b16 %v95
    %v199 = vunpack.c.l.b16 %v96
    %v200 = vunpack.c.h.b16 %v96
    %v201 = vunpack.c.l.b16 %v97
    %v202 = vunpack.c.h.b16 %v97
    %v203 = vunpack.c.l.b16 %v98
    %v204 = vunpack.c.h.b16 %v98
    %v205 = vunpack.c.l.b16 %v99
    %v206 = vunpack.c.h.b16 %v99
    %v207 = vunpack.c.l.b16 %v100
    %v208 = vunpack.c.h.b16 %v100
    %v209 = vunpack.c.l.b16 %v101
    %v210 = vunpack.c.h.b16 %v101
    %v211 = vunpack.c.l.b16 %v102
    %v212 = vunpack.c.h.b16 %v102
    %v213 = vunpack.c.l.b16 %v103
    %v214 = vunpack.c.h.b16 %v103
    %v215 = vunpack.c.l.b16 %v104
    %v216 = vunpack.c.h.b16 %v104
    %v217 = vunpack.c.l.b16 %v105
    %v218 = vunpack.c.h.b16 %v105
    %v219 = vunpack.c.l.b16 %v106
    %v220 = vunpack.c.h.b16 %v106
    %v221 = vpack.c.b16 %v165, %v157
    %v222 = vpack.c.b16 %v166, %v158
    %v223 = vpack.c.b16 %v167, %v159
    %v224 = vpack.c.b16 %v168, %v160
    %v225 = vpack.c.b16 %v169, %v161
    %v226 = vpack.c.b16 %v170, %v162
    %v227 = vpack.c.b16 %v171, %v163
    %v228 = vpack.c.b16 %v172, %v164
    %v229 = vpack.c.b16 %v181, %v173
    %v230 = vpack.c.b16 %v182, %v174
    %v231 = vpack.c.b16 %v183, %v175
    %v232 = vpack.c.b16 %v184, %v176
    %v233 = vpack.c.b16 %v185, %v177
    %v234 = vpack.c.b16 %v186, %v178
    %v235 = vpack.c.b16 %v187, %v179
    %v236 = vpack.c.b16 %v188, %v180
    %v237 = vpack.c.b16 %v197, %v189
    %v238 = vpack.c.b16 %v198, %v190
    %v239 = vpack.c.b16 %v199, %v191
    %v240 = vpack.c.b16 %v200, %v192
    %v241 = vpack.c.b16 %v201, %v193
    %v242 = vpack.c.b16 %v202, %v194
    %v243 = vpack.c.b16 %v203, %v195
    %v244 = vpack.c.b16 %v204, %v196
    %v245 = vpack.c.b16 %v213, %v205
    %v246 = vpack.c.b16 %v214, %v206
    %v247 = vpack.c.b16 %v215, %v207
    %v248 = vpack.c.b16 %v216, %v208
    %v249 = vpack.c.b16 %v217, %v209
    %v250 = vpack.c.b16 %v218, %v210
    %v251 = vpack.c.b16 %v219, %v211
    %v252 = vpack.c.b16 %v220, %v212
    %vm285 = vcmask 523264
    %v287 = vsel %vm285, %v74, 0
    %289 = vmatpush.bf16.msra.mxu0 0
    %290 = vmatpush.bf16.msra.mxu0 0
    %291 = vmatpush.bf16.msra.mxu0 0
    %292 = vmatpush.bf16.msra.mxu0 0
    %293 = vmatpush.bf16.msra.mxu0 %v245
    %294 = vmatpush.bf16.msra.mxu0 %v237
    %295 = vmatpush.bf16.msra.mxu0 %v229
    %296 = vmatpush.bf16.msra.mxu0 %v221
    %297 = vmatmul.bf16.gmra.mxu0 %v287
    %v298 = vpop.f32.mrf.mxu0
    %v299 = vadd.f32 %v109, %v298
    %v300 = vpop.f32.mrf.mxu0
    %301 = vdwg.mxu0
    %302 = vmatpush.bf16.msra.mxu0 0
    %303 = vmatpush.bf16.msra.mxu0 0
    %304 = vmatpush.bf16.msra.mxu0 0
    %305 = vmatpush.bf16.msra.mxu0 0
    %306 = vmatpush.bf16.msra.mxu0 %v246
    %307 = vmatpush.bf16.msra.mxu0 %v238
    %308 = vmatpush.bf16.msra.mxu0 %v230
    %309 = vmatpush.bf16.msra.mxu0 %v222
    %310 = vmatmul.bf16.gmra.mxu0 %v287
    %v311 = vpop.f32.mrf.mxu0
    %v312 = vadd.f32 %v110, %v311
    %v313 = vpop.f32.mrf.mxu0
    %314 = vdwg.mxu0
    %315 = vmatpush.bf16.msra.mxu0 0
    %316 = vmatpush.bf16.msra.mxu0 0
    %317 = vmatpush.bf16.msra.mxu0 0
    %318 = vmatpush.bf16.msra.mxu0 0
    %319 = vmatpush.bf16.msra.mxu0 %v247
    %320 = vmatpush.bf16.msra.mxu0 %v239
    %321 = vmatpush.bf16.msra.mxu0 %v231
    %322 = vmatpush.bf16.msra.mxu0 %v223
    %323 = vmatmul.bf16.gmra.mxu0 %v287
    %v324 = vpop.f32.mrf.mxu0
    %v325 = vadd.f32 %v111, %v324
    %v326 = vpop.f32.mrf.mxu0
    %327 = vdwg.mxu0
    %328 = vmatpush.bf16.msra.mxu0 0
    %329 = vmatpush.bf16.msra.mxu0 0
    %330 = vmatpush.bf16.msra.mxu0 0
    %331 = vmatpush.bf16.msra.mxu0 0
    %332 = vmatpush.bf16.msra.mxu0 %v248
    %333 = vmatpush.bf16.msra.mxu0 %v240
    %334 = vmatpush.bf16.msra.mxu0 %v232
    %335 = vmatpush.bf16.msra.mxu0 %v224
    %336 = vmatmul.bf16.gmra.mxu0 %v287
    %v337 = vpop.f32.mrf.mxu0
    %v338 = vadd.f32 %v112, %v337
    %v339 = vpop.f32.mrf.mxu0
    %340 = vdwg.mxu0
    %341 = vmatpush.bf16.msra.mxu0 0
    %342 = vmatpush.bf16.msra.mxu0 0
    %343 = vmatpush.bf16.msra.mxu0 0
    %344 = vmatpush.bf16.msra.mxu0 0
    %345 = vmatpush.bf16.msra.mxu0 %v249
    %346 = vmatpush.bf16.msra.mxu0 %v241
    %347 = vmatpush.bf16.msra.mxu0 %v233
    %348 = vmatpush.bf16.msra.mxu0 %v225
    %349 = vmatmul.bf16.gmra.mxu0 %v287
    %v350 = vpop.f32.mrf.mxu0
    %v351 = vadd.f32 %v113, %v350
    %v352 = vpop.f32.mrf.mxu0
    %353 = vdwg.mxu0
    %354 = vmatpush.bf16.msra.mxu0 0
    %355 = vmatpush.bf16.msra.mxu0 0
    %356 = vmatpush.bf16.msra.mxu0 0
    %357 = vmatpush.bf16.msra.mxu0 0
    %358 = vmatpush.bf16.msra.mxu0 %v250
    %359 = vmatpush.bf16.msra.mxu0 %v242
    %360 = vmatpush.bf16.msra.mxu0 %v234
    %361 = vmatpush.bf16.msra.mxu0 %v226
    %362 = vmatmul.bf16.gmra.mxu0 %v287
    %v363 = vpop.f32.mrf.mxu0
    %v364 = vadd.f32 %v114, %v363
    %v365 = vpop.f32.mrf.mxu0
    %366 = vdwg.mxu0
    %367 = vmatpush.bf16.msra.mxu0 0
    %368 = vmatpush.bf16.msra.mxu0 0
    %369 = vmatpush.bf16.msra.mxu0 0
    %370 = vmatpush.bf16.msra.mxu0 0
    %371 = vmatpush.bf16.msra.mxu0 %v251
    %372 = vmatpush.bf16.msra.mxu0 %v243
    %373 = vmatpush.bf16.msra.mxu0 %v235
    %374 = vmatpush.bf16.msra.mxu0 %v227
    %375 = vmatmul.bf16.gmra.mxu0 %v287
    %v376 = vpop.f32.mrf.mxu0
    %v377 = vadd.f32 %v115, %v376
    %v378 = vpop.f32.mrf.mxu0
    %379 = vdwg.mxu0
    %380 = vmatpush.bf16.msra.mxu0 0
    %381 = vmatpush.bf16.msra.mxu0 0
    %382 = vmatpush.bf16.msra.mxu0 0
    %383 = vmatpush.bf16.msra.mxu0 0
    %384 = vmatpush.bf16.msra.mxu0 %v252
    %385 = vmatpush.bf16.msra.mxu0 %v244
    %386 = vmatpush.bf16.msra.mxu0 %v236
    %387 = vmatpush.bf16.msra.mxu0 %v228
    %388 = vmatmul.bf16.gmra.mxu0 %v287
    %v389 = vpop.f32.mrf.mxu0
    %v390 = vadd.f32 %v116, %v389
    %v391 = vpop.f32.mrf.mxu0
    %392 = vdwg.mxu0
    %v393 = vmax.f32 %v299, 0.0
    %v394 = vmax.f32 %v312, 0.0
    %v395 = vmax.f32 %v325, 0.0
    %v396 = vmax.f32 %v338, 0.0
    %v397 = vmax.f32 %v351, 0.0
    %v398 = vmax.f32 %v364, 0.0
    %v399 = vmax.f32 %v377, 0.0
    %v400 = vmax.f32 %v390, 0.0
    %v401 = vpack.c.bf16 %v393, %v393
    %v402 = vpack.c.bf16 %v394, %v394
    %v403 = vpack.c.bf16 %v395, %v395
    %v404 = vpack.c.bf16 %v396, %v396
    %v405 = vpack.c.bf16 %v397, %v397
    %v406 = vpack.c.bf16 %v398, %v398
    %v407 = vpack.c.bf16 %v399, %v399
    %v408 = vpack.c.bf16 %v400, %v400
    %v409 = vld [vmem:[%s5] sm:$0xf]
    %v410 = vld [vmem:[%s5 + $0x4] sm:$0xf]
    %v411 = vld [vmem:[%s5 + $0x8] sm:$0xf]
    %v412 = vld [vmem:[%s5 + $0xc] sm:$0xf]
    %v413 = vld [vmem:[%s5 + $0x10] sm:$0xf]
    %v414 = vld [vmem:[%s5 + $0x14] sm:$0xf]
    %v415 = vld [vmem:[%s5 + $0x18] sm:$0xf]
    %v416 = vld [vmem:[%s5 + $0x1c] sm:$0xf]
    %v417 = vld [vmem:[%s5 + $0x20] sm:$0xf]
    %v418 = vld [vmem:[%s5 + $0x24] sm:$0xf]
    %v419 = vld [vmem:[%s5 + $0x28] sm:$0xf]
    %v420 = vld [vmem:[%s5 + $0x2c] sm:$0xf]
    %v421 = vld [vmem:[%s5 + $0x30] sm:$0xf]
    %v422 = vld [vmem:[%s5 + $0x34] sm:$0xf]
    %v423 = vld [vmem:[%s5 + $0x38] sm:$0xf]
    %v424 = vld [vmem:[%s5 + $0x3c] sm:$0xf]
    %v425 = vld [vmem:[%s5 + $0x40] sm:$0xf]
    %v426 = vld [vmem:[%s5 + $0x44] sm:$0xf]
    %v427 = vld [vmem:[%s5 + $0x48] sm:$0xf]
    %v428 = vld [vmem:[%s5 + $0x4c] sm:$0xf]
    %v429 = vld [vmem:[%s5 + $0x50] sm:$0xf]
    %v430 = vld [vmem:[%s5 + $0x54] sm:$0xf]
    %v431 = vld [vmem:[%s5 + $0x58] sm:$0xf]
    %v432 = vld [vmem:[%s5 + $0x5c] sm:$0xf]
    %v433 = vld [vmem:[%s5 + $0x60] sm:$0xf]
    %v434 = vld [vmem:[%s5 + $0x64] sm:$0xf]
    %v435 = vld [vmem:[%s5 + $0x68] sm:$0xf]
    %v436 = vld [vmem:[%s5 + $0x6c] sm:$0xf]
    %v437 = vld [vmem:[%s5 + $0x70] sm:$0xf]
    %v438 = vld [vmem:[%s5 + $0x74] sm:$0xf]
    %v439 = vld [vmem:[%s5 + $0x78] sm:$0xf]
    %v440 = vld [vmem:[%s5 + $0x7c] sm:$0xf]
    %v441 = vld [vmem:[%s5 + $0x80] sm:$0xf]
    %v442 = vld [vmem:[%s5 + $0x84] sm:$0xf]
    %v443 = vld [vmem:[%s5 + $0x88] sm:$0xf]
    %v444 = vld [vmem:[%s5 + $0x8c] sm:$0xf]
    %v445 = vld [vmem:[%s5 + $0x90] sm:$0xf]
    %v446 = vld [vmem:[%s5 + $0x94] sm:$0xf]
    %v447 = vld [vmem:[%s5 + $0x98] sm:$0xf]
    %v448 = vld [vmem:[%s5 + $0x9c] sm:$0xf]
    %v449 = vld [vmem:[%s5 + $0xa0] sm:$0xf]
    %v450 = vld [vmem:[%s5 + $0xa4] sm:$0xf]
    %v451 = vld [vmem:[%s5 + $0xa8] sm:$0xf]
    %v452 = vld [vmem:[%s5 + $0xac] sm:$0xf]
    %v453 = vld [vmem:[%s5 + $0xb0] sm:$0xf]
    %v454 = vld [vmem:[%s5 + $0xb4] sm:$0xf]
    %v455 = vld [vmem:[%s5 + $0xb8] sm:$0xf]
    %v456 = vld [vmem:[%s5 + $0xbc] sm:$0xf]
    %v457 = vld [vmem:[%s5 + $0xc0] sm:$0xf]
    %v458 = vld [vmem:[%s5 + $0xc4] sm:$0xf]
    %v459 = vld [vmem:[%s5 + $0xc8] sm:$0xf]
    %v460 = vld [vmem:[%s5 + $0xcc] sm:$0xf]
    %v461 = vld [vmem:[%s5 + $0xd0] sm:$0xf]
    %v462 = vld [vmem:[%s5 + $0xd4] sm:$0xf]
    %v463 = vld [vmem:[%s5 + $0xd8] sm:$0xf]
    %v464 = vld [vmem:[%s5 + $0xdc] sm:$0xf]
    %v465 = vld [vmem:[%s5 + $0xe0] sm:$0xf]
    %v466 = vld [vmem:[%s5 + $0xe4] sm:$0xf]
    %v467 = vld [vmem:[%s5 + $0xe8] sm:$0xf]
    %v468 = vld [vmem:[%s5 + $0xec] sm:$0xf]
    %v469 = vld [vmem:[%s5 + $0xf0] sm:$0xf]
    %v470 = vld [vmem:[%s5 + $0xf4] sm:$0xf]
    %v471 = vld [vmem:[%s5 + $0xf8] sm:$0xf]
    %v472 = vld [vmem:[%s5 + $0xfc] sm:$0xf]
    %v473 = vld [vmem:[%s5 + $0x100] sm:$0xf]
    %v474 = vld [vmem:[%s5 + $0x104] sm:$0xf]
    %v475 = vld [vmem:[%s5 + $0x108] sm:$0xf]
    %v476 = vld [vmem:[%s5 + $0x10c] sm:$0xf]
    %v477 = vld [vmem:[%s5 + $0x110] sm:$0xf]
    %v478 = vld [vmem:[%s5 + $0x114] sm:$0xf]
    %v479 = vld [vmem:[%s5 + $0x118] sm:$0xf]
    %v480 = vld [vmem:[%s5 + $0x11c] sm:$0xf]
    %v481 = vld [vmem:[%s5 + $0x120] sm:$0xf]
    %v482 = vld [vmem:[%s5 + $0x124] sm:$0xf]
    %v483 = vld [vmem:[%s5 + $0x128] sm:$0xf]
    %v484 = vld [vmem:[%s5 + $0x12c] sm:$0xf]
    %v485 = vld [vmem:[%s5 + $0x130] sm:$0xf]
    %v486 = vld [vmem:[%s5 + $0x134] sm:$0xf]
    %v487 = vld [vmem:[%s5 + $0x138] sm:$0xf]
    %v488 = vld [vmem:[%s5 + $0x13c] sm:$0xf]
    %v489 = vld [vmem:[%s5 + $0x140] sm:$0xf]
    %v490 = vld [vmem:[%s5 + $0x144] sm:$0xf]
    %v491 = vld [vmem:[%s5 + $0x148] sm:$0xf]
    %v492 = vld [vmem:[%s5 + $0x14c] sm:$0xf]
    %v493 = vld [vmem:[%s5 + $0x150] sm:$0xf]
    %v494 = vld [vmem:[%s5 + $0x154] sm:$0xf]
    %v495 = vld [vmem:[%s5 + $0x158] sm:$0xf]
    %v496 = vld [vmem:[%s5 + $0x15c] sm:$0xf]
    %v497 = vld [vmem:[%s5 + $0x160] sm:$0xf]
    %v498 = vld [vmem:[%s5 + $0x164] sm:$0xf]
    %v499 = vld [vmem:[%s5 + $0x168] sm:$0xf]
    %v500 = vld [vmem:[%s5 + $0x16c] sm:$0xf]
    %v501 = vld [vmem:[%s5 + $0x170] sm:$0xf]
    %v502 = vld [vmem:[%s5 + $0x174] sm:$0xf]
    %v503 = vld [vmem:[%s5 + $0x178] sm:$0xf]
    %v504 = vld [vmem:[%s5 + $0x17c] sm:$0xf]
    %v505 = vld [vmem:[%s5 + $0x180] sm:$0xf]
    %v506 = vld [vmem:[%s5 + $0x184] sm:$0xf]
    %v507 = vld [vmem:[%s5 + $0x188] sm:$0xf]
    %v508 = vld [vmem:[%s5 + $0x18c] sm:$0xf]
    %v509 = vld [vmem:[%s5 + $0x190] sm:$0xf]
    %v510 = vld [vmem:[%s5 + $0x194] sm:$0xf]
    %v511 = vld [vmem:[%s5 + $0x198] sm:$0xf]
    %v512 = vld [vmem:[%s5 + $0x19c] sm:$0xf]
    %v513 = vld [vmem:[%s5 + $0x1a0] sm:$0xf]
    %v514 = vld [vmem:[%s5 + $0x1a4] sm:$0xf]
    %v515 = vld [vmem:[%s5 + $0x1a8] sm:$0xf]
    %v516 = vld [vmem:[%s5 + $0x1ac] sm:$0xf]
    %v517 = vld [vmem:[%s5 + $0x1b0] sm:$0xf]
    %v518 = vld [vmem:[%s5 + $0x1b4] sm:$0xf]
    %v519 = vld [vmem:[%s5 + $0x1b8] sm:$0xf]
    %v520 = vld [vmem:[%s5 + $0x1bc] sm:$0xf]
    %v521 = vld [vmem:[%s5 + $0x1c0] sm:$0xf]
    %v522 = vld [vmem:[%s5 + $0x1c4] sm:$0xf]
    %v523 = vld [vmem:[%s5 + $0x1c8] sm:$0xf]
    %v524 = vld [vmem:[%s5 + $0x1cc] sm:$0xf]
    %v525 = vld [vmem:[%s5 + $0x1d0] sm:$0xf]
    %v526 = vld [vmem:[%s5 + $0x1d4] sm:$0xf]
    %v527 = vld [vmem:[%s5 + $0x1d8] sm:$0xf]
    %v528 = vld [vmem:[%s5 + $0x1dc] sm:$0xf]
    %v529 = vld [vmem:[%s5 + $0x1e0] sm:$0xf]
    %v530 = vld [vmem:[%s5 + $0x1e4] sm:$0xf]
    %v531 = vld [vmem:[%s5 + $0x1e8] sm:$0xf]
    %v532 = vld [vmem:[%s5 + $0x1ec] sm:$0xf]
    %v533 = vld [vmem:[%s5 + $0x1f0] sm:$0xf]
    %v534 = vld [vmem:[%s5 + $0x1f4] sm:$0xf]
    %v535 = vld [vmem:[%s5 + $0x1f8] sm:$0xf]
    %v536 = vld [vmem:[%s5 + $0x1fc] sm:$0xf]
    %v537 = vld [vmem:[%s6] sm:$0x1]
    %v539 = vperm.slane %v537, 0
    %v669 = vunpack.c.l.b16 %v409
    %v670 = vunpack.c.l.b16 %v410
    %v671 = vunpack.c.l.b16 %v411
    %v672 = vunpack.c.l.b16 %v412
    %v673 = vunpack.c.l.b16 %v413
    %v674 = vunpack.c.l.b16 %v414
    %v675 = vunpack.c.l.b16 %v415
    %v676 = vunpack.c.l.b16 %v416
    %v677 = vunpack.c.l.b16 %v417
    %v678 = vunpack.c.l.b16 %v418
    %v679 = vunpack.c.l.b16 %v419
    %v680 = vunpack.c.l.b16 %v420
    %v681 = vunpack.c.l.b16 %v421
    %v682 = vunpack.c.l.b16 %v422
    %v683 = vunpack.c.l.b16 %v423
    %v684 = vunpack.c.l.b16 %v424
    %v685 = vunpack.c.l.b16 %v425
    %v686 = vunpack.c.l.b16 %v426
    %v687 = vunpack.c.l.b16 %v427
    %v688 = vunpack.c.l.b16 %v428
    %v689 = vunpack.c.l.b16 %v429
    %v690 = vunpack.c.l.b16 %v430
    %v691 = vunpack.c.l.b16 %v431
    %v692 = vunpack.c.l.b16 %v432
    %v693 = vunpack.c.l.b16 %v433
    %v694 = vunpack.c.l.b16 %v434
    %v695 = vunpack.c.l.b16 %v435
    %v696 = vunpack.c.l.b16 %v436
    %v697 = vunpack.c.l.b16 %v437
    %v698 = vunpack.c.l.b16 %v438
    %v699 = vunpack.c.l.b16 %v439
    %v700 = vunpack.c.l.b16 %v440
    %v701 = vunpack.c.l.b16 %v441
    %v702 = vunpack.c.l.b16 %v442
    %v703 = vunpack.c.l.b16 %v443
    %v704 = vunpack.c.l.b16 %v444
    %v705 = vunpack.c.l.b16 %v445
    %v706 = vunpack.c.l.b16 %v446
    %v707 = vunpack.c.l.b16 %v447
    %v708 = vunpack.c.l.b16 %v448
    %v709 = vunpack.c.l.b16 %v449
    %v710 = vunpack.c.l.b16 %v450
    %v711 = vunpack.c.l.b16 %v451
    %v712 = vunpack.c.l.b16 %v452
    %v713 = vunpack.c.l.b16 %v453
    %v714 = vunpack.c.l.b16 %v454
    %v715 = vunpack.c.l.b16 %v455
    %v716 = vunpack.c.l.b16 %v456
    %v717 = vunpack.c.l.b16 %v457
    %v718 = vunpack.c.l.b16 %v458
    %v719 = vunpack.c.l.b16 %v459
    %v720 = vunpack.c.l.b16 %v460
    %v721 = vunpack.c.l.b16 %v461
    %v722 = vunpack.c.l.b16 %v462
    %v723 = vunpack.c.l.b16 %v463
    %v724 = vunpack.c.l.b16 %v464
    %v725 = vunpack.c.l.b16 %v465
    %v726 = vunpack.c.l.b16 %v466
    %v727 = vunpack.c.l.b16 %v467
    %v728 = vunpack.c.l.b16 %v468
    %v729 = vunpack.c.l.b16 %v469
    %v730 = vunpack.c.l.b16 %v470
    %v731 = vunpack.c.l.b16 %v471
    %v732 = vunpack.c.l.b16 %v472
    %v733 = vunpack.c.l.b16 %v473
    %v734 = vunpack.c.l.b16 %v474
    %v735 = vunpack.c.l.b16 %v475
    %v736 = vunpack.c.l.b16 %v476
    %v737 = vunpack.c.l.b16 %v477
    %v738 = vunpack.c.l.b16 %v478
    %v739 = vunpack.c.l.b16 %v479
    %v740 = vunpack.c.l.b16 %v480
    %v741 = vunpack.c.l.b16 %v481
    %v742 = vunpack.c.l.b16 %v482
    %v743 = vunpack.c.l.b16 %v483
    %v744 = vunpack.c.l.b16 %v484
    %v745 = vunpack.c.l.b16 %v485
    %v746 = vunpack.c.l.b16 %v486
    %v747 = vunpack.c.l.b16 %v487
    %v748 = vunpack.c.l.b16 %v488
    %v749 = vunpack.c.l.b16 %v489
    %v750 = vunpack.c.l.b16 %v490
    %v751 = vunpack.c.l.b16 %v491
    %v752 = vunpack.c.l.b16 %v492
    %v753 = vunpack.c.l.b16 %v493
    %v754 = vunpack.c.l.b16 %v494
    %v755 = vunpack.c.l.b16 %v495
    %v756 = vunpack.c.l.b16 %v496
    %v757 = vunpack.c.l.b16 %v497
    %v758 = vunpack.c.l.b16 %v498
    %v759 = vunpack.c.l.b16 %v499
    %v760 = vunpack.c.l.b16 %v500
    %v761 = vunpack.c.l.b16 %v501
    %v762 = vunpack.c.l.b16 %v502
    %v763 = vunpack.c.l.b16 %v503
    %v764 = vunpack.c.l.b16 %v504
    %v765 = vunpack.c.l.b16 %v505
    %v766 = vunpack.c.l.b16 %v506
    %v767 = vunpack.c.l.b16 %v507
    %v768 = vunpack.c.l.b16 %v508
    %v769 = vunpack.c.l.b16 %v509
    %v770 = vunpack.c.l.b16 %v510
    %v771 = vunpack.c.l.b16 %v511
    %v772 = vunpack.c.l.b16 %v512
    %v773 = vunpack.c.l.b16 %v513
    %v774 = vunpack.c.l.b16 %v514
    %v775 = vunpack.c.l.b16 %v515
    %v776 = vunpack.c.l.b16 %v516
    %v777 = vunpack.c.l.b16 %v517
    %v778 = vunpack.c.l.b16 %v518
    %v779 = vunpack.c.l.b16 %v519
    %v780 = vunpack.c.l.b16 %v520
    %v781 = vunpack.c.l.b16 %v521
    %v782 = vunpack.c.l.b16 %v522
    %v783 = vunpack.c.l.b16 %v523
    %v784 = vunpack.c.l.b16 %v524
    %v785 = vunpack.c.l.b16 %v525
    %v786 = vunpack.c.l.b16 %v526
    %v787 = vunpack.c.l.b16 %v527
    %v788 = vunpack.c.l.b16 %v528
    %v789 = vunpack.c.l.b16 %v529
    %v790 = vunpack.c.l.b16 %v530
    %v791 = vunpack.c.l.b16 %v531
    %v792 = vunpack.c.l.b16 %v532
    %v793 = vunpack.c.l.b16 %v533
    %v794 = vunpack.c.l.b16 %v534
    %v795 = vunpack.c.l.b16 %v535
    %v796 = vunpack.c.l.b16 %v536
    %v797 = vpack.c.b16 %v670, %v669
    %v798 = vpack.c.b16 %v672, %v671
    %v799 = vpack.c.b16 %v674, %v673
    %v800 = vpack.c.b16 %v676, %v675
    %v801 = vpack.c.b16 %v678, %v677
    %v802 = vpack.c.b16 %v680, %v679
    %v803 = vpack.c.b16 %v682, %v681
    %v804 = vpack.c.b16 %v684, %v683
    %v805 = vpack.c.b16 %v686, %v685
    %v806 = vpack.c.b16 %v688, %v687
    %v807 = vpack.c.b16 %v690, %v689
    %v808 = vpack.c.b16 %v692, %v691
    %v809 = vpack.c.b16 %v694, %v693
    %v810 = vpack.c.b16 %v696, %v695
    %v811 = vpack.c.b16 %v698, %v697
    %v812 = vpack.c.b16 %v700, %v699
    %v813 = vpack.c.b16 %v702, %v701
    %v814 = vpack.c.b16 %v704, %v703
    %v815 = vpack.c.b16 %v706, %v705
    %v816 = vpack.c.b16 %v708, %v707
    %v817 = vpack.c.b16 %v710, %v709
    %v818 = vpack.c.b16 %v712, %v711
    %v819 = vpack.c.b16 %v714, %v713
    %v820 = vpack.c.b16 %v716, %v715
    %v821 = vpack.c.b16 %v718, %v717
    %v822 = vpack.c.b16 %v720, %v719
    %v823 = vpack.c.b16 %v722, %v721
    %v824 = vpack.c.b16 %v724, %v723
    %v825 = vpack.c.b16 %v726, %v725
    %v826 = vpack.c.b16 %v728, %v727
    %v827 = vpack.c.b16 %v730, %v729
    %v828 = vpack.c.b16 %v732, %v731
    %v829 = vpack.c.b16 %v734, %v733
    %v830 = vpack.c.b16 %v736, %v735
    %v831 = vpack.c.b16 %v738, %v737
    %v832 = vpack.c.b16 %v740, %v739
    %v833 = vpack.c.b16 %v742, %v741
    %v834 = vpack.c.b16 %v744, %v743
    %v835 = vpack.c.b16 %v746, %v745
    %v836 = vpack.c.b16 %v748, %v747
    %v837 = vpack.c.b16 %v750, %v749
    %v838 = vpack.c.b16 %v752, %v751
    %v839 = vpack.c.b16 %v754, %v753
    %v840 = vpack.c.b16 %v756, %v755
    %v841 = vpack.c.b16 %v758, %v757
    %v842 = vpack.c.b16 %v760, %v759
    %v843 = vpack.c.b16 %v762, %v761
    %v844 = vpack.c.b16 %v764, %v763
    %v845 = vpack.c.b16 %v766, %v765
    %v846 = vpack.c.b16 %v768, %v767
    %v847 = vpack.c.b16 %v770, %v769
    %v848 = vpack.c.b16 %v772, %v771
    %v849 = vpack.c.b16 %v774, %v773
    %v850 = vpack.c.b16 %v776, %v775
    %v851 = vpack.c.b16 %v778, %v777
    %v852 = vpack.c.b16 %v780, %v779
    %v853 = vpack.c.b16 %v782, %v781
    %v854 = vpack.c.b16 %v784, %v783
    %v855 = vpack.c.b16 %v786, %v785
    %v856 = vpack.c.b16 %v788, %v787
    %v857 = vpack.c.b16 %v790, %v789
    %v858 = vpack.c.b16 %v792, %v791
    %v859 = vpack.c.b16 %v794, %v793
    %v860 = vpack.c.b16 %v796, %v795
    %925 = vmatpush.bf16.msra.mxu0 %v804
    %926 = vmatpush.bf16.msra.mxu0 %v803
    %927 = vmatpush.bf16.msra.mxu0 %v802
    %928 = vmatpush.bf16.msra.mxu0 %v801
    %929 = vmatpush.bf16.msra.mxu0 %v800
    %930 = vmatpush.bf16.msra.mxu0 %v799
    %931 = vmatpush.bf16.msra.mxu0 %v798
    %932 = vmatpush.bf16.msra.mxu0 %v797
    %933 = vmatmul.bf16.gmra.mxu0 %v401
    %v934 = vpop.f32.mrf.mxu0
    %v935 = vadd.f32 %v539, %v934
    %v936 = vpop.f32.mrf.mxu0
    %937 = vdwg.mxu0
    %938 = vmatpush.bf16.msra.mxu0 %v812
    %939 = vmatpush.bf16.msra.mxu0 %v811
    %940 = vmatpush.bf16.msra.mxu0 %v810
    %941 = vmatpush.bf16.msra.mxu0 %v809
    %942 = vmatpush.bf16.msra.mxu0 %v808
    %943 = vmatpush.bf16.msra.mxu0 %v807
    %944 = vmatpush.bf16.msra.mxu0 %v806
    %945 = vmatpush.bf16.msra.mxu0 %v805
    %946 = vmatmul.bf16.gmra.mxu0 %v402
    %v947 = vpop.f32.mrf.mxu0
    %v948 = vadd.f32 %v935, %v947
    %v949 = vpop.f32.mrf.mxu0
    %950 = vdwg.mxu0
    %951 = vmatpush.bf16.msra.mxu0 %v820
    %952 = vmatpush.bf16.msra.mxu0 %v819
    %953 = vmatpush.bf16.msra.mxu0 %v818
    %954 = vmatpush.bf16.msra.mxu0 %v817
    %955 = vmatpush.bf16.msra.mxu0 %v816
    %956 = vmatpush.bf16.msra.mxu0 %v815
    %957 = vmatpush.bf16.msra.mxu0 %v814
    %958 = vmatpush.bf16.msra.mxu0 %v813
    %959 = vmatmul.bf16.gmra.mxu0 %v403
    %v960 = vpop.f32.mrf.mxu0
    %v961 = vadd.f32 %v948, %v960
    %v962 = vpop.f32.mrf.mxu0
    %963 = vdwg.mxu0
    %964 = vmatpush.bf16.msra.mxu0 %v828
    %965 = vmatpush.bf16.msra.mxu0 %v827
    %966 = vmatpush.bf16.msra.mxu0 %v826
    %967 = vmatpush.bf16.msra.mxu0 %v825
    %968 = vmatpush.bf16.msra.mxu0 %v824
    %969 = vmatpush.bf16.msra.mxu0 %v823
    %970 = vmatpush.bf16.msra.mxu0 %v822
    %971 = vmatpush.bf16.msra.mxu0 %v821
    %972 = vmatmul.bf16.gmra.mxu0 %v404
    %v973 = vpop.f32.mrf.mxu0
    %v974 = vadd.f32 %v961, %v973
    %v975 = vpop.f32.mrf.mxu0
    %976 = vdwg.mxu0
    %977 = vmatpush.bf16.msra.mxu0 %v836
    %978 = vmatpush.bf16.msra.mxu0 %v835
    %979 = vmatpush.bf16.msra.mxu0 %v834
    %980 = vmatpush.bf16.msra.mxu0 %v833
    %981 = vmatpush.bf16.msra.mxu0 %v832
    %982 = vmatpush.bf16.msra.mxu0 %v831
    %983 = vmatpush.bf16.msra.mxu0 %v830
    %984 = vmatpush.bf16.msra.mxu0 %v829
    %985 = vmatmul.bf16.gmra.mxu0 %v405
    %v986 = vpop.f32.mrf.mxu0
    %v987 = vadd.f32 %v974, %v986
    %v988 = vpop.f32.mrf.mxu0
    %989 = vdwg.mxu0
    %990 = vmatpush.bf16.msra.mxu0 %v844
    %991 = vmatpush.bf16.msra.mxu0 %v843
    %992 = vmatpush.bf16.msra.mxu0 %v842
    %993 = vmatpush.bf16.msra.mxu0 %v841
    %994 = vmatpush.bf16.msra.mxu0 %v840
    %995 = vmatpush.bf16.msra.mxu0 %v839
    %996 = vmatpush.bf16.msra.mxu0 %v838
    %997 = vmatpush.bf16.msra.mxu0 %v837
    %998 = vmatmul.bf16.gmra.mxu0 %v406
    %v999 = vpop.f32.mrf.mxu0
    %v1000 = vadd.f32 %v987, %v999
    %v1001 = vpop.f32.mrf.mxu0
    %1002 = vdwg.mxu0
    %1003 = vmatpush.bf16.msra.mxu0 %v852
    %1004 = vmatpush.bf16.msra.mxu0 %v851
    %1005 = vmatpush.bf16.msra.mxu0 %v850
    %1006 = vmatpush.bf16.msra.mxu0 %v849
    %1007 = vmatpush.bf16.msra.mxu0 %v848
    %1008 = vmatpush.bf16.msra.mxu0 %v847
    %1009 = vmatpush.bf16.msra.mxu0 %v846
    %1010 = vmatpush.bf16.msra.mxu0 %v845
    %1011 = vmatmul.bf16.gmra.mxu0 %v407
    %v1012 = vpop.f32.mrf.mxu0
    %v1013 = vadd.f32 %v1000, %v1012
    %v1014 = vpop.f32.mrf.mxu0
    %1015 = vdwg.mxu0
    %1016 = vmatpush.bf16.msra.mxu0 %v860
    %1017 = vmatpush.bf16.msra.mxu0 %v859
    %1018 = vmatpush.bf16.msra.mxu0 %v858
    %1019 = vmatpush.bf16.msra.mxu0 %v857
    %1020 = vmatpush.bf16.msra.mxu0 %v856
    %1021 = vmatpush.bf16.msra.mxu0 %v855
    %1022 = vmatpush.bf16.msra.mxu0 %v854
    %1023 = vmatpush.bf16.msra.mxu0 %v853
    %1024 = vmatmul.bf16.gmra.mxu0 %v408
    %v1025 = vpop.f32.mrf.mxu0
    %v1026 = vadd.f32 %v1013, %v1025
    %v1027 = vpop.f32.mrf.mxu0
    %1028 = vdwg.mxu0
    %v1029 = vmax.f32 %v1026, 0.0
    %v1030 = vpack.c.bf16 %v1029, %v1029
    %v1031 = vld [vmem:[%s7] sm:$0xf]
    %v1032 = vld [vmem:[%s7 + $0x4] sm:$0xf]
    %v1033 = vld [vmem:[%s7 + $0x8] sm:$0xf]
    %v1034 = vld [vmem:[%s7 + $0xc] sm:$0xf]
    %v1035 = vld [vmem:[%s7 + $0x10] sm:$0xf]
    %v1036 = vld [vmem:[%s7 + $0x14] sm:$0xf]
    %v1037 = vld [vmem:[%s7 + $0x18] sm:$0xf]
    %v1038 = vld [vmem:[%s7 + $0x1c] sm:$0xf]
    %v1039 = vld [vmem:[%s8] sm:$0x1]
    %v1041 = vperm.slane %v1039, 0
    %v1051 = vunpack.c.l.b16 %v1031
    %v1052 = vunpack.c.l.b16 %v1032
    %v1053 = vunpack.c.l.b16 %v1033
    %v1054 = vunpack.c.l.b16 %v1034
    %v1055 = vunpack.c.l.b16 %v1035
    %v1056 = vunpack.c.l.b16 %v1036
    %v1057 = vunpack.c.l.b16 %v1037
    %v1058 = vunpack.c.l.b16 %v1038
    %v1059 = vpack.c.b16 %v1052, %v1051
    %v1060 = vpack.c.b16 %v1054, %v1053
    %v1061 = vpack.c.b16 %v1056, %v1055
    %v1062 = vpack.c.b16 %v1058, %v1057
    %v1068 = vsel %vm285, %v1030, 0
    %1070 = vmatpush.bf16.msra.mxu0 0
    %1071 = vmatpush.bf16.msra.mxu0 0
    %1072 = vmatpush.bf16.msra.mxu0 0
    %1073 = vmatpush.bf16.msra.mxu0 0
    %1074 = vmatpush.bf16.msra.mxu0 %v1062
    %1075 = vmatpush.bf16.msra.mxu0 %v1061
    %1076 = vmatpush.bf16.msra.mxu0 %v1060
    %1077 = vmatpush.bf16.msra.mxu0 %v1059
    %1078 = vmatmul.bf16.gmra.mxu0 %v1068
    %v1079 = vpop.f32.mrf.mxu0
    %v1080 = vadd.f32 %v1041, %v1079
    %v1081 = vpop.f32.mrf.mxu0
    %1082 = vdwg.mxu0
    %1083 = vst [vmem:[#allocation2] sm:$0xff] %v1080
    // Predicated region
    $region38: #{tpu_custom_call.1} parent=1 // pred_check
      _
    $region39: #{tpu_custom_call.1} parent=1 // pred_check_branch
      %1085 = sbr.rel (0) target = $region41
    $region40: #{tpu_custom_call.1} parent=1 // pred_region
      %1087 = vsyncadd [#allocation3], 0
      %s1089 = sshll.u32 [#allocation2], 4
      %s1090 = int_to_ptr.vmem [resolvable:$true] %s1089
      %s1091 = sshll.u32 %s9, 4
      %s1092 = int_to_ptr.hbm [resolvable:$true] %s1091
      %1094 = dma.vmem_to_hbm [thread:$0]  %s1090, 128, %s1092, [#allocation3]
    $region41: #{tpu_custom_call.1} parent=1 // pred_fallthru
      _
    // Predicated region
    $region42: #{tpu_custom_call.1} parent=1 // pred_check
      _
    $region43: #{tpu_custom_call.1} parent=1 // pred_check_branch
      %1096 = sbr.rel (0) target = $region45
    $region44: #{tpu_custom_call.1} parent=1 // pred_region
      %1098 = dma.done [#allocation3], 128
    $region45: #{tpu_custom_call.1} parent=1 // pred_fallthru
      _
    %1099 = vsyncpa [#allocation3], 1

</llo_original>
